<compile_context>
chip_gen: v7x
topology: tpu7x:2x2x1
jax: 0.10.0
libtpu: 0.0.40
codegen_flags: <defaults>
</compile_context>

<pallas_src>
import functools

import jax
import jax.numpy as jnp
from jax.experimental import pallas as pl
from jax.experimental.pallas import tpu as pltpu

LANE = 128  # TPU lane width; every feature dim is padded to this


def _round_up(x, m):
    return (x + m - 1) // m * m


def generator_kernel(zc_ref, w_ref, b_ref, out_ref, *, latent_dim):
    # zc_ref : (bt, 128)      z in lanes [0, L), c in lanes [L, L+C), zeros elsewhere
    # w_ref  : (5, 128, 128)  zero-padded per-layer weights (in_features x out_features)
    # b_ref  : (5, 128)       zero-padded per-layer biases
    zc = zc_ref[...]

    # --- mapping: Linear -> ReLU -> Linear -> ReLU ---
    # c lanes contribute nothing here: weight rows [L, 128) are zero.  Padded
    # output lanes stay exactly 0 (zero weight cols, zero bias, ReLU(0)=0).
    h = jnp.dot(zc, w_ref[0], preferred_element_type=jnp.float32) + b_ref[0:1, :]
    h = jnp.maximum(h, 0.0)
    w = jnp.dot(h, w_ref[1], preferred_element_type=jnp.float32) + b_ref[1:2, :]
    w = jnp.maximum(w, 0.0)  # confined to lanes [0, L)

    # torch.cat([w, c], dim=1): w occupies lanes [0,L), c occupies [L,L+C) of the
    # merged input, so masking the merged input and adding rebuilds the concat.
    lane = jax.lax.broadcasted_iota(jnp.int32, zc.shape, dimension=1)
    wc = w + jnp.where(lane >= latent_dim, zc, 0.0)

    # --- synthesis: Linear -> LeakyReLU(0.2) -> Linear -> LeakyReLU(0.2) -> Linear ---
    h3 = jnp.dot(wc, w_ref[2], preferred_element_type=jnp.float32) + b_ref[2:3, :]
    h3 = jnp.where(h3 > 0, h3, 0.2 * h3)
    h4 = jnp.dot(h3, w_ref[3], preferred_element_type=jnp.float32) + b_ref[3:4, :]
    h4 = jnp.where(h4 > 0, h4, 0.2 * h4)
    out = jnp.dot(h4, w_ref[4], preferred_element_type=jnp.float32) + b_ref[4:5, :]
    out_ref[...] = out.astype(out_ref.dtype)


def _pick_tiles(batch):
    """Batch tile (multiple of 8, <=512 rows) and padded batch.

    For >=128 rows we force >=2 grid steps so the "parallel" grid axis can be
    sharded across a v7x megacore's two TensorCores; on v5e/v6e the extra step
    costs ~0.35 us, which is noise.  Padding is bounded by one tile, not a
    fixed 128 multiple.
    """
    rows = _round_up(batch, 8)
    if rows >= 128:
        n_tiles = max(2, pl.cdiv(rows, 512))
    else:
        n_tiles = 1
    bt = _round_up(pl.cdiv(rows, n_tiles), 8)
    return bt, n_tiles * bt


def _pack_zc(z, c, bp, latent_dim, c_dim):
    """Single lane-dense, zero-padded activation input: z || c in disjoint lanes."""
    batch = z.shape[0]
    zc = jnp.zeros((bp, LANE), jnp.float32)
    zc = zc.at[:batch, :latent_dim].set(z)
    zc = zc.at[:batch, latent_dim:latent_dim + c_dim].set(c)
    return zc


def _jnp_forward_packed(z, c, w_slab, b_slab, dims):
    """Small-batch fallback: identical math on the packed slabs, plain XLA."""
    latent_dim, c_dim, data_dim, _ = dims
    zc = _pack_zc(z, c, z.shape[0], latent_dim, c_dim)
    h = jnp.maximum(zc @ w_slab[0] + b_slab[0], 0.0)
    w = jnp.maximum(h @ w_slab[1] + b_slab[1], 0.0)
    mask = (jnp.arange(LANE) >= latent_dim).astype(jnp.float32)
    wc = w + zc * mask
    h3 = wc @ w_slab[2] + b_slab[2]
    h3 = jnp.where(h3 > 0, h3, 0.2 * h3)
    h4 = h3 @ w_slab[3] + b_slab[3]
    h4 = jnp.where(h4 > 0, h4, 0.2 * h4)
    out = h4 @ w_slab[4] + b_slab[4]
    return out[:, :data_dim]


def generator_forward(z, c, packed, dims, *, min_kernel_batch=64):
    latent_dim, c_dim, data_dim, hidden_dim = dims
    assert max(latent_dim, latent_dim + c_dim, 2 * hidden_dim, data_dim) <= LANE
    w_slab, b_slab = packed
    batch = z.shape[0]

    # At a handful of rows the whole model is a few vregs: kernel dispatch and
    # the weight DMA dominate, so let XLA's fused dot chain handle it.
    if batch < min_kernel_batch:
        return _jnp_forward_packed(z, c, w_slab, b_slab, dims)

    bt, bp = _pick_tiles(batch)
    grid = (bp // bt,)
    zc = _pack_zc(z, c, bp, latent_dim, c_dim)

    # Padded, actually-executed work: 5 dots of [bp,128] x [128,128].
    cost = pl.CostEstimate(
        flops=2 * 5 * bp * LANE * LANE,
        transcendentals=0,
        bytes_accessed=4 * (zc.size + w_slab.size + b_slab.size + bp * LANE),
    )

    kernel = functools.partial(generator_kernel, latent_dim=latent_dim)
    out_pad = pl.pallas_call(
        kernel,
        out_shape=jax.ShapeDtypeStruct((bp, LANE), jnp.float32),
        grid_spec=pltpu.PrefetchScalarGridSpec(
            num_scalar_prefetch=0,
            grid=grid,
            in_specs=[
                pl.BlockSpec((bt, LANE), lambda i: (i, 0)),          # merged z||c tile
                pl.BlockSpec((5, LANE, LANE), lambda i: (0, 0, 0)),  # weights: VMEM-resident
                pl.BlockSpec((5, LANE), lambda i: (0, 0)),           # biases: VMEM-resident
            ],
            out_specs=pl.BlockSpec((bt, LANE), lambda i: (i, 0)),
        ),
        compiler_params=pltpu.CompilerParams(
            dimension_semantics=("parallel",)),  # >=2 batch tiles shard across v7x's 2 TCs
        cost_estimate=cost,
    )(zc, w_slab, b_slab)
    return out_pad[:batch, :data_dim]


def init_params(key, latent_dim, c_dim, data_dim, hidden_dim):
    """Deterministic uniform(-1/sqrt(fan_in), 1/sqrt(fan_in)) init, like nn.Linear."""
    def linear(k, fan_in, fan_out):
        kw, kb = jax.random.split(k)
        bound = 1.0 / jnp.sqrt(fan_in)
        w = jax.random.uniform(kw, (fan_in, fan_out), jnp.float32, -bound, bound)
        b = jax.random.uniform(kb, (fan_out,), jnp.float32, -bound, bound)
        return w, b

    keys = jax.random.split(key, 5)
    return [
        linear(keys[0], latent_dim, latent_dim),              # mapping 1
        linear(keys[1], latent_dim, latent_dim),              # mapping 2
        linear(keys[2], latent_dim + c_dim, hidden_dim * 2),  # synthesis 1 (on concat)
        linear(keys[3], hidden_dim * 2, hidden_dim),          # synthesis 2
        linear(keys[4], hidden_dim, data_dim),                # synthesis out
    ]


def pack_params(layers):
    """Pack the 5 (W, b) pairs into one zero-padded [5,128,128] weight slab and
    one [5,128] bias slab.  Zero padding keeps all padded lanes exactly 0
    through every layer (ReLU/LeakyReLU(0)=0), so padded K=128 dots are exact."""
    w_slab = jnp.zeros((len(layers), LANE, LANE), jnp.float32)
    b_slab = jnp.zeros((len(layers), LANE), jnp.float32)
    for i, (w, b) in enumerate(layers):
        k, n = w.shape
        w_slab = w_slab.at[i, :k, :n].set(w)
        b_slab = b_slab.at[i, :n].set(b)
    return w_slab, b_slab


def reference_forward(z, c, layers):
    (w1, b1), (w2, b2), (w3, b3), (w4, b4), (w5, b5) = layers
    h = jnp.maximum(z @ w1 + b1, 0.0)
    w = jnp.maximum(h @ w2 + b2, 0.0)
    wc = jnp.concatenate([w, c], axis=1)
    h3 = wc @ w3 + b3
    h3 = jnp.where(h3 > 0, h3, 0.2 * h3)
    h4 = h3 @ w4 + b4
    h4 = jnp.where(h4 > 0, h4, 0.2 * h4)
    return h4 @ w5 + b5


if __name__ == "__main__":
    latent_dim, c_dim, data_dim, hidden_dim = 32, 16, 64, 32
    dims = (latent_dim, c_dim, data_dim, hidden_dim)

    key = jax.random.PRNGKey(0)
    kz, kc, kp, kz2, kc2 = jax.random.split(key, 5)

    layers = init_params(kp, *dims)
    packed = pack_params(layers)

    # 1) Kernel path with a >=2-step "parallel" grid and non-trivial padding
    #    (batch=200 -> 2 tiles of 104 rows, bp=208).
    batch = 200
    z = jax.random.normal(kz, (batch, latent_dim), jnp.float32)
    c = jax.random.normal(kc, (batch, c_dim), jnp.float32)
    out = jax.block_until_ready(generator_forward(z, c, packed, dims))
    ref = reference_forward(z, c, layers)
    assert out.shape == (batch, data_dim)
    assert jnp.allclose(out, ref, atol=1e-4, rtol=1e-4), float(jnp.max(jnp.abs(out - ref)))

    # 2) Kernel path forced at tiny batch (grid=(1,), 8-row tile).
    bs = 8
    z8 = jax.random.normal(kz2, (bs, latent_dim), jnp.float32)
    c8 = jax.random.normal(kc2, (bs, c_dim), jnp.float32)
    out8 = jax.block_until_ready(generator_forward(z8, c8, packed, dims, min_kernel_batch=1))
    ref8 = reference_forward(z8, c8, layers)
    assert jnp.allclose(out8, ref8, atol=1e-4, rtol=1e-4), float(jnp.max(jnp.abs(out8 - ref8)))

    # 3) Auto small-batch fallback (plain jnp on the packed slabs).
    out_fb = jax.block_until_ready(generator_forward(z8, c8, packed, dims))
    assert jnp.allclose(out_fb, ref8, atol=1e-4, rtol=1e-4)

    print("KERNEL_OK")
</pallas_src>

<mosaic_0001>
module attributes {stable_mosaic.version = 11 : i64} {
  func.func @generator_kernel(%arg0: i32, %arg1: memref<104x128xf32, #tpu.memory_space<vmem>>, %arg2: memref<5x128x128xf32, #tpu.memory_space<vmem>>, %arg3: memref<5x128xf32, #tpu.memory_space<vmem>>, %arg4: memref<104x128xf32, #tpu.memory_space<vmem>>) attributes {dimension_semantics = [#tpu.dimension_semantics<parallel>], iteration_bounds = array<i64: 2>, scalar_prefetch = 0 : i64, scratch_operands = 0 : i64, tpu.core_type = #tpu.core_type<tc>, window_params = [{transform_indices = @transform_0, window_bounds = array<i64: 104, 128>}, {pipeline_mode = #tpu.pipeline_mode<synchronous>, transform_indices = @transform_1, window_bounds = array<i64: 5, 128, 128>}, {pipeline_mode = #tpu.pipeline_mode<synchronous>, transform_indices = @transform_2, window_bounds = array<i64: 5, 128>}, {transform_indices = @transform_3, window_bounds = array<i64: 104, 128>}]} {
    %c0 = arith.constant 0 : index
    %c0_0 = arith.constant 0 : index
    %0 = vector.load %arg1[%c0, %c0_0] : memref<104x128xf32, #tpu.memory_space<vmem>>, vector<104x128xf32>
    %c0_1 = arith.constant 0 : index
    %c0_2 = arith.constant 0 : index
    %c0_3 = arith.constant 0 : index
    %1 = vector.load %arg2[%c0_1, %c0_2, %c0_3] : memref<5x128x128xf32, #tpu.memory_space<vmem>>, vector<1x128x128xf32>
    %2 = vector.shape_cast %1 : vector<1x128x128xf32> to vector<128x128xf32>
    %cst = arith.constant dense<0.000000e+00> : vector<104x128xf32>
    %3 = tpu.matmul %0, %2, %cst {dimension_numbers = #tpu.dot_dimension_numbers<[1], [0], [0], [1], [0, 0, 1, 1], [], []>} : vector<104x128xf32>, vector<128x128xf32>, vector<104x128xf32> -> vector<104x128xf32>
    %c0_4 = arith.constant 0 : index
    %c0_5 = arith.constant 0 : index
    %4 = vector.load %arg3[%c0_4, %c0_5] : memref<5x128xf32, #tpu.memory_space<vmem>>, vector<1x128xf32>
    %5 = vector.broadcast %4 : vector<1x128xf32> to vector<104x128xf32>
    %6 = arith.addf %3, %5 : vector<104x128xf32>
    %cst_6 = arith.constant 0.000000e+00 : f32
    %7 = vector.broadcast %cst_6 : f32 to vector<104x128xf32>
    %8 = arith.maximumf %6, %7 : vector<104x128xf32>
    %c1 = arith.constant 1 : index
    %c0_7 = arith.constant 0 : index
    %c0_8 = arith.constant 0 : index
    %9 = vector.load %arg2[%c1, %c0_7, %c0_8] : memref<5x128x128xf32, #tpu.memory_space<vmem>>, vector<1x128x128xf32>
    %10 = vector.shape_cast %9 : vector<1x128x128xf32> to vector<128x128xf32>
    %cst_9 = arith.constant dense<0.000000e+00> : vector<104x128xf32>
    %11 = tpu.matmul %8, %10, %cst_9 {dimension_numbers = #tpu.dot_dimension_numbers<[1], [0], [0], [1], [0, 0, 1, 1], [], []>} : vector<104x128xf32>, vector<128x128xf32>, vector<104x128xf32> -> vector<104x128xf32>
    %c1_10 = arith.constant 1 : index
    %c0_11 = arith.constant 0 : index
    %12 = vector.load %arg3[%c1_10, %c0_11] : memref<5x128xf32, #tpu.memory_space<vmem>>, vector<1x128xf32>
    %13 = vector.broadcast %12 : vector<1x128xf32> to vector<104x128xf32>
    %14 = arith.addf %11, %13 : vector<104x128xf32>
    %cst_12 = arith.constant 0.000000e+00 : f32
    %15 = vector.broadcast %cst_12 : f32 to vector<104x128xf32>
    %16 = arith.maximumf %14, %15 : vector<104x128xf32>
    %17 = tpu.iota {dimensions = array<i32: 1>} : vector<104x128xi32>
    %c32_i32 = arith.constant 32 : i32
    %18 = vector.broadcast %c32_i32 : i32 to vector<104x128xi32>
    %19 = arith.cmpi sge, %17, %18 : vector<104x128xi32>
    %cst_13 = arith.constant 0.000000e+00 : f32
    %20 = vector.broadcast %cst_13 : f32 to vector<104x128xf32>
    %21 = arith.select %19, %0, %20 : vector<104x128xi1>, vector<104x128xf32>
    %22 = arith.addf %16, %21 : vector<104x128xf32>
    %c2 = arith.constant 2 : index
    %c0_14 = arith.constant 0 : index
    %c0_15 = arith.constant 0 : index
    %23 = vector.load %arg2[%c2, %c0_14, %c0_15] : memref<5x128x128xf32, #tpu.memory_space<vmem>>, vector<1x128x128xf32>
    %24 = vector.shape_cast %23 : vector<1x128x128xf32> to vector<128x128xf32>
    %cst_16 = arith.constant dense<0.000000e+00> : vector<104x128xf32>
    %25 = tpu.matmul %22, %24, %cst_16 {dimension_numbers = #tpu.dot_dimension_numbers<[1], [0], [0], [1], [0, 0, 1, 1], [], []>} : vector<104x128xf32>, vector<128x128xf32>, vector<104x128xf32> -> vector<104x128xf32>
    %c2_17 = arith.constant 2 : index
    %c0_18 = arith.constant 0 : index
    %26 = vector.load %arg3[%c2_17, %c0_18] : memref<5x128xf32, #tpu.memory_space<vmem>>, vector<1x128xf32>
    %27 = vector.broadcast %26 : vector<1x128xf32> to vector<104x128xf32>
    %28 = arith.addf %25, %27 : vector<104x128xf32>
    %cst_19 = arith.constant 0.000000e+00 : f32
    %29 = vector.broadcast %cst_19 : f32 to vector<104x128xf32>
    %30 = arith.cmpf ogt, %28, %29 : vector<104x128xf32>
    %cst_20 = arith.constant 2.000000e-01 : f32
    %31 = vector.broadcast %cst_20 : f32 to vector<104x128xf32>
    %32 = arith.mulf %31, %28 : vector<104x128xf32>
    %33 = arith.select %30, %28, %32 : vector<104x128xi1>, vector<104x128xf32>
    %c3 = arith.constant 3 : index
    %c0_21 = arith.constant 0 : index
    %c0_22 = arith.constant 0 : index
    %34 = vector.load %arg2[%c3, %c0_21, %c0_22] : memref<5x128x128xf32, #tpu.memory_space<vmem>>, vector<1x128x128xf32>
    %35 = vector.shape_cast %34 : vector<1x128x128xf32> to vector<128x128xf32>
    %cst_23 = arith.constant dense<0.000000e+00> : vector<104x128xf32>
    %36 = tpu.matmul %33, %35, %cst_23 {dimension_numbers = #tpu.dot_dimension_numbers<[1], [0], [0], [1], [0, 0, 1, 1], [], []>} : vector<104x128xf32>, vector<128x128xf32>, vector<104x128xf32> -> vector<104x128xf32>
    %c3_24 = arith.constant 3 : index
    %c0_25 = arith.constant 0 : index
    %37 = vector.load %arg3[%c3_24, %c0_25] : memref<5x128xf32, #tpu.memory_space<vmem>>, vector<1x128xf32>
    %38 = vector.broadcast %37 : vector<1x128xf32> to vector<104x128xf32>
    %39 = arith.addf %36, %38 : vector<104x128xf32>
    %cst_26 = arith.constant 0.000000e+00 : f32
    %40 = vector.broadcast %cst_26 : f32 to vector<104x128xf32>
    %41 = arith.cmpf ogt, %39, %40 : vector<104x128xf32>
    %cst_27 = arith.constant 2.000000e-01 : f32
    %42 = vector.broadcast %cst_27 : f32 to vector<104x128xf32>
    %43 = arith.mulf %42, %39 : vector<104x128xf32>
    %44 = arith.select %41, %39, %43 : vector<104x128xi1>, vector<104x128xf32>
    %c4 = arith.constant 4 : index
    %c0_28 = arith.constant 0 : index
    %c0_29 = arith.constant 0 : index
    %45 = vector.load %arg2[%c4, %c0_28, %c0_29] : memref<5x128x128xf32, #tpu.memory_space<vmem>>, vector<1x128x128xf32>
    %46 = vector.shape_cast %45 : vector<1x128x128xf32> to vector<128x128xf32>
    %cst_30 = arith.constant dense<0.000000e+00> : vector<104x128xf32>
    %47 = tpu.matmul %44, %46, %cst_30 {dimension_numbers = #tpu.dot_dimension_numbers<[1], [0], [0], [1], [0, 0, 1, 1], [], []>} : vector<104x128xf32>, vector<128x128xf32>, vector<104x128xf32> -> vector<104x128xf32>
    %c4_31 = arith.constant 4 : index
    %c0_32 = arith.constant 0 : index
    %48 = vector.load %arg3[%c4_31, %c0_32] : memref<5x128xf32, #tpu.memory_space<vmem>>, vector<1x128xf32>
    %49 = vector.broadcast %48 : vector<1x128xf32> to vector<104x128xf32>
    %50 = arith.addf %47, %49 : vector<104x128xf32>
    %c0_33 = arith.constant 0 : index
    %c0_34 = arith.constant 0 : index
    %51 = vector.load %arg4[%c0_33, %c0_34] : memref<104x128xf32, #tpu.memory_space<vmem>>, vector<104x128xf32>
    tpu.vector_store %arg4[%c0_33, %c0_34], %50 {strides = array<i32>} : memref<104x128xf32, #tpu.memory_space<vmem>>, vector<104x128xf32>,
    return
  }
  func.func @transform_0(%arg0: i32) -> (i32, i32) {
    %c0_i32 = arith.constant 0 : i32
    %c0_i32_0 = arith.constant 0 : i32
    return %arg0, %c0_i32 : i32, i32
  }
  func.func @transform_1(%arg0: i32) -> (i32, i32, i32) {
    %c0_i32 = arith.constant 0 : i32
    %c0_i32_0 = arith.constant 0 : i32
    %c0_i32_1 = arith.constant 0 : i32
    %c0_i32_2 = arith.constant 0 : i32
    return %c0_i32, %c0_i32_0, %c0_i32_1 : i32, i32, i32
  }
  func.func @transform_2(%arg0: i32) -> (i32, i32) {
    %c0_i32 = arith.constant 0 : i32
    %c0_i32_0 = arith.constant 0 : i32
    %c0_i32_1 = arith.constant 0 : i32
    return %c0_i32, %c0_i32_0 : i32, i32
  }
  func.func @transform_3(%arg0: i32) -> (i32, i32) {
    %c0_i32 = arith.constant 0 : i32
    %c0_i32_0 = arith.constant 0 : i32
    return %arg0, %c0_i32 : i32, i32
  }
}

</mosaic_0001>

<llo_original>
// kernel: tpu_custom_call.1
$region0: #{tpu_custom_call.1}
  #allocation0 [shape = 'u32[]', space=smem, size = 0x4, offset = 0x4, fixed_abs, tag = 'smem constant byte address 0x4 - core index']
  #allocation1 [shape = 'u32[144,128]{1,0:T(1,128)}', space=vmem, size = 0x12000, scoped, tag = 'internal scratch']
  %s0 = inlined_call_operand.hbm [shape: f32[208,128], index: 0, kind: input, shape index: {}]
  %s1 = inlined_call_operand.hbm [shape: f32[5,128,128], index: 1, kind: input, shape index: {}]
  %s2 = inlined_call_operand.hbm [shape: f32[5,128], index: 2, kind: input, shape index: {}]
  %s3 = inlined_call_operand.hbm [shape: f32[208,128], index: 3, kind: output, shape index: {}]
  %s4 = sld [smem:[#allocation0]]
  $region57: #{tpu_custom_call.1} parent=0
    _
  %s6 = ssub.s32 1, %s4
  %s7 = scalar_select 0, %s6, %s4
  $region1: #{tpu_custom_call.1} parent=0
    #allocation2 [shape = 'u8[106496]{0}', space=vmem, size = 0x1a000, scoped, tag = 'input window, operand 0']
    #allocation3 [shape = 's32[2]{0}', space=sflag, size = 0x8, scoped, tag = 'scoped memory for tpu_custom_call.1']
    #allocation4 [shape = 's32[2]{0}', space=sflag, size = 0x8, scoped, tag = 'scoped memory for tpu_custom_call.1']
    #allocation5 [shape = 'u8[327680]{0}', space=vmem, size = 0x50000, scoped, tag = 'input window, operand 1, single buffered']
    #allocation6 [shape = 's32[1]{0}', space=sflag, size = 0x4, scoped, tag = 'scoped memory for tpu_custom_call.1']
    #allocation7 [shape = 'u8[4096]{0}', space=vmem, size = 0x1000, scoped, tag = 'input window, operand 2, single buffered']
    #allocation8 [shape = 'u8[106496]{0}', space=vmem, size = 0x1a000, scoped, tag = 'output window, operand 0']
    %8 = vsyncpa [#allocation3], 0
    %s9 = scalar_lea.sflag [#allocation3], 1
    %10 = vsyncpa %s9, 0
    %11 = vsyncpa [#allocation6], 0
    %12 = vsyncpa [#allocation4], 0
    %s13 = scalar_lea.sflag [#allocation4], 1
    %14 = vsyncpa %s13, 0
    loop: start=0, step=1, limit=4
    $region2: #{tpu_custom_call.1} parent=1 // loop_pre_header
      _
    $region3: #{tpu_custom_call.1} parent=1 // loop_header
      %s16 = sphi 0, %s20
      %p17 = scmp.ge.s32.totalorder %s16, 4
      %s26 = sphi 0, %s28
      %s29 = sphi 0, %s26
      %s30 = sphi 0, %s29
      %s46 = sphi 0, %s30
      %s50 = sphi 0, %s50
      %s52 = sphi 0, %s50
      %s53 = sphi 0, %s52
      %s67 = sphi 0, %s53
      %s71 = sphi 0, %s71
      %s73 = sphi 0, %s71
      %s74 = sphi 0, %s73
      %s88 = sphi 0, %s74
      %s94 = sphi 0, %s96
      %s97 = sphi 0, %s94
      %s98 = sphi 0, %s97
      %s114 = sphi 0, %s98
    $region4: #{tpu_custom_call.1} parent=1 // loop_header_branch
      %19 = sbr.rel (%p17) target = $region8
    $region5: #{tpu_custom_call.1} parent=1 // loop_body
      %s21 = ssub.s32 %s16, 1
      %s22 = ssub.s32 %s16, 2
      %s23 = sadd.s32 %s16, 1
      %s24 = ssub.s32 %s16, %s23
      %p25 = scmp.eq.s32.totalorder %s24, 0
      %s27 = sadd.s32 %s26, 1
      %s28 = scalar_select %p25, %s26, %s27
      %p31 = pneg %p25
      %p32 = scmp.eq.s32.totalorder %s16, 1
      %p33 = por %p31, %p32
      %p34 = scmp.ne.s32.totalorder %s26, %s29
      %p35 = scmp.eq.s32.totalorder %s16, 0
      %p36 = por %p34, %p35
      %p37 = scmp.ne.s32.totalorder %s26, %s29
      %p38 = scmp.eq.s32.totalorder %s21, 1
      %p39 = por %p37, %p38
      %p40 = scmp.ne.s32.totalorder %s29, %s30
      %p41 = scmp.eq.s32.totalorder %s21, 0
      %p42 = por %p40, %p41
      %p43 = scmp.ne.s32.totalorder %s29, %s30
      %p44 = scmp.eq.s32.totalorder %s22, 1
      %p45 = por %p43, %p44
      %p47 = scmp.ne.s32.totalorder %s30, %s46
      %p48 = scmp.eq.s32.totalorder %s22, 0
      %p49 = por %p47, %p48
      %s51 = sadd.s32 %s50, 1
      %p54 = scmp.eq.s32.totalorder %s16, 1
      %p55 = scmp.ne.s32.totalorder %s50, %s52
      %p56 = scmp.eq.s32.totalorder %s16, 0
      %p57 = por %p55, %p56
      %p58 = scmp.ne.s32.totalorder %s50, %s52
      %p59 = scmp.eq.s32.totalorder %s21, 1
      %p60 = por %p58, %p59
      %p61 = scmp.ne.s32.totalorder %s52, %s53
      %p62 = scmp.eq.s32.totalorder %s21, 0
      %p63 = por %p61, %p62
      %p64 = scmp.ne.s32.totalorder %s52, %s53
      %p65 = scmp.eq.s32.totalorder %s22, 1
      %p66 = por %p64, %p65
      %p68 = scmp.ne.s32.totalorder %s53, %s67
      %p69 = scmp.eq.s32.totalorder %s22, 0
      %p70 = por %p68, %p69
      %s72 = sadd.s32 %s71, 1
      %p75 = scmp.eq.s32.totalorder %s16, 1
      %p76 = scmp.ne.s32.totalorder %s71, %s73
      %p77 = scmp.eq.s32.totalorder %s16, 0
      %p78 = por %p76, %p77
      %p79 = scmp.ne.s32.totalorder %s71, %s73
      %p80 = scmp.eq.s32.totalorder %s21, 1
      %p81 = por %p79, %p80
      %p82 = scmp.ne.s32.totalorder %s73, %s74
      %p83 = scmp.eq.s32.totalorder %s21, 0
      %p84 = por %p82, %p83
      %p85 = scmp.ne.s32.totalorder %s73, %s74
      %p86 = scmp.eq.s32.totalorder %s22, 1
      %p87 = por %p85, %p86
      %p89 = scmp.ne.s32.totalorder %s74, %s88
      %p90 = scmp.eq.s32.totalorder %s22, 0
      %p91 = por %p89, %p90
      %s92 = ssub.s32 %s16, %s23
      %p93 = scmp.eq.s32.totalorder %s92, 0
      %s95 = sadd.s32 %s94, 1
      %s96 = scalar_select %p93, %s94, %s95
      %p99 = pneg %p93
      %p100 = scmp.eq.s32.totalorder %s16, 1
      %p101 = por %p99, %p100
      %p102 = scmp.ne.s32.totalorder %s94, %s97
      %p103 = scmp.eq.s32.totalorder %s16, 0
      %p104 = por %p102, %p103
      %p105 = scmp.ne.s32.totalorder %s94, %s97
      %p106 = scmp.eq.s32.totalorder %s21, 1
      %p107 = por %p105, %p106
      %p108 = scmp.ne.s32.totalorder %s97, %s98
      %p109 = scmp.eq.s32.totalorder %s21, 0
      %p110 = por %p108, %p109
      %p111 = scmp.ne.s32.totalorder %s97, %s98
      %p112 = scmp.eq.s32.totalorder %s22, 1
      %p113 = por %p111, %p112
      %p115 = scmp.ne.s32.totalorder %s98, %s114
      %p116 = scmp.eq.s32.totalorder %s22, 0
      %p117 = por %p115, %p116
      %p118 = scmp.le.s32.totalorder 1, %s16
      %p119 = scmp.lt.s32.totalorder %s16, 3
      %p120 = pnand %p118, %p119
      %p121 = pneg %p120
      // Predicated region
      $region9: #{tpu_custom_call.1} parent=5 // pred_check
        _
      $region10: #{tpu_custom_call.1} parent=5 // pred_check_branch
        %123 = sbr.rel (%p120) target = $region12
      $region11: #{tpu_custom_call.1} parent=5 // pred_region
        %s124 = ssub.s32 %s16, 1
        // Predicated region
        $region13: #{tpu_custom_call.1} parent=11 // pred_check
          %p125 = pneg %p63
        $region14: #{tpu_custom_call.1} parent=11 // pred_check_branch
          %127 = sbr.rel (%p125) target = $region16
        $region15: #{tpu_custom_call.1} parent=11 // pred_region
          %s129 = ssub.s32 10240, 10240
          %130 = vsyncadd [#allocation6], %s129
          %s131 = sshll.u32 [#allocation5], 4
          %s132 = int_to_ptr.vmem [resolvable:$true] %s131
          %137 = dma.hbm_to_vmem [thread:$0]  %s1, 10240, %s132, [#allocation6], 128, 128, 8
        $region16: #{tpu_custom_call.1} parent=11 // pred_fallthru
          _
        // Predicated region
        $region17: #{tpu_custom_call.1} parent=11 // pred_check
          %p138 = pneg %p84
        $region18: #{tpu_custom_call.1} parent=11 // pred_check_branch
          %140 = sbr.rel (%p138) target = $region20
        $region19: #{tpu_custom_call.1} parent=11 // pred_region
          %s142 = ssub.s32 128, 128
          %143 = vsyncadd [#allocation6], %s142
          %s145 = sshll.u32 [#allocation7], 4
          %s146 = int_to_ptr.vmem [resolvable:$true] %s145
          %148 = dma.hbm_to_vmem [thread:$0]  %s2, 128, %s146, [#allocation6]
        $region20: #{tpu_custom_call.1} parent=11 // pred_fallthru
          _
      $region12: #{tpu_custom_call.1} parent=5 // pred_fallthru
        _
      %p149 = scmp.lt.s32.totalorder %s16, 2
      // Predicated region
      $region21: #{tpu_custom_call.1} parent=5 // pred_check
        %p150 = pneg %p149
      $region22: #{tpu_custom_call.1} parent=5 // pred_check_branch
        %152 = sbr.rel (%p150) target = $region24
      $region23: #{tpu_custom_call.1} parent=5 // pred_region
        // Predicated region
        $region25: #{tpu_custom_call.1} parent=23 // pred_check
          %p153 = pneg %p36
        $region26: #{tpu_custom_call.1} parent=23 // pred_check_branch
          %155 = sbr.rel (%p153) target = $region28
        $region27: #{tpu_custom_call.1} parent=23 // pred_region
          %s156 = sand.u32 %s26, 1
          %s157 = scalar_lea.sflag [#allocation3], %s156
          %s158 = sand.u32 %s26, 1
          %s159 = smul.addr %s158, 104
          %s160 = scalar_lea.vmem [#allocation2], %s159
          %s161 = smul.u32 13, %s16
          %s163 = ssub.s32 1664, 1664
          %164 = vsyncadd %s157, %s163
          %s165 = smul.addr %s161, 128
          %s166 = scalar_lea.hbm %s0, %s165
          %s167 = sshll.u32 %s160, 4
          %s168 = int_to_ptr.vmem [resolvable:$true] %s167
          %173 = dma.hbm_to_vmem [thread:$0]  %s166, 1664, %s168, %s157, 128, 128, 8
        $region28: #{tpu_custom_call.1} parent=23 // pred_fallthru
          _
      $region24: #{tpu_custom_call.1} parent=5 // pred_fallthru
        _
      %p174 = scmp.le.s32.totalorder 1, %s16
      %p175 = scmp.lt.s32.totalorder %s16, 3
      %p176 = pnand %p174, %p175
      %p177 = pneg %p176
      // Predicated region
      $region29: #{tpu_custom_call.1} parent=5 // pred_check
        _
      $region30: #{tpu_custom_call.1} parent=5 // pred_check_branch
        %179 = sbr.rel (%p176) target = $region32
      $region31: #{tpu_custom_call.1} parent=5 // pred_region
        %s180 = ssub.s32 %s16, 1
        %s181 = sand.u32 %s29, 1
        %s182 = scalar_lea.sflag [#allocation3], %s181
        %s183 = sand.u32 %s29, 1
        %s184 = smul.addr %s183, 104
        %s185 = scalar_lea.vmem [#allocation2], %s184
        // Predicated region
        $region33: #{tpu_custom_call.1} parent=31 // pred_check
          %p186 = pneg %p42
        $region34: #{tpu_custom_call.1} parent=31 // pred_check_branch
          %188 = sbr.rel (%p186) target = $region36
        $region35: #{tpu_custom_call.1} parent=31 // pred_region
          %189 = dma.done %s182, 1664
        $region36: #{tpu_custom_call.1} parent=31 // pred_fallthru
          _
        // Predicated region
        $region37: #{tpu_custom_call.1} parent=31 // pred_check
          %p190 = pneg %p63
        $region38: #{tpu_custom_call.1} parent=31 // pred_check_branch
          %192 = sbr.rel (%p190) target = $region40
        $region39: #{tpu_custom_call.1} parent=31 // pred_region
          %193 = dma.done [#allocation6], 10240
        $region40: #{tpu_custom_call.1} parent=31 // pred_fallthru
          _
        // Predicated region
        $region41: #{tpu_custom_call.1} parent=31 // pred_check
          %p194 = pneg %p84
        $region42: #{tpu_custom_call.1} parent=31 // pred_check_branch
          %196 = sbr.rel (%p194) target = $region44
        $region43: #{tpu_custom_call.1} parent=31 // pred_region
          %197 = dma.done [#allocation6], 128
        $region44: #{tpu_custom_call.1} parent=31 // pred_fallthru
          _
        %s198 = sand.u32 %s29, 1
        %s199 = scalar_lea.sflag [#allocation3], %s198
        %s200 = sand.u32 %s29, 1
        %s201 = smul.addr %s200, 104
        %s202 = scalar_lea.vmem [#allocation2], %s201
        %p203 = pneg %p42
        %p204 = pneg %p39
        %p205 = pneg %p63
        %p206 = pneg %p60
        %p207 = pneg %p84
        %p208 = pneg %p81
        %p209 = pneg %p110
        %p210 = pneg %p107
        %s211 = sand.u32 %s97, 1
        %s212 = scalar_lea.sflag [#allocation4], %s211
        %s213 = sand.u32 %s97, 1
        %s214 = smul.addr %s213, 104
        %s215 = scalar_lea.vmem [#allocation8], %s214
        %s216 = smul.u32 13, %s21
        %s217 = smul.u32 13, %s21
        %v218 = vld [vmem:[%s185] sm:$0xff]
        %v219 = vld [vmem:[%s185 + $0x8] sm:$0xff]
        %v220 = vld [vmem:[%s185 + $0x10] sm:$0xff]
        %v221 = vld [vmem:[%s185 + $0x18] sm:$0xff]
        %v222 = vld [vmem:[%s185 + $0x20] sm:$0xff]
        %v223 = vld [vmem:[%s185 + $0x28] sm:$0xff]
        %v224 = vld [vmem:[%s185 + $0x30] sm:$0xff]
        %v225 = vld [vmem:[%s185 + $0x38] sm:$0xff]
        %v226 = vld [vmem:[%s185 + $0x40] sm:$0xff]
        %v227 = vld [vmem:[%s185 + $0x48] sm:$0xff]
        %v228 = vld [vmem:[%s185 + $0x50] sm:$0xff]
        %v229 = vld [vmem:[%s185 + $0x58] sm:$0xff]
        %v230 = vld [vmem:[%s185 + $0x60] sm:$0xff]
        %v231 = vld [vmem:[#allocation5] sm:$0xff]
        %v232 = vld [vmem:[#allocation5 + $0x8] sm:$0xff]
        %v233 = vld [vmem:[#allocation5 + $0x10] sm:$0xff]
        %v234 = vld [vmem:[#allocation5 + $0x18] sm:$0xff]
        %v235 = vld [vmem:[#allocation5 + $0x20] sm:$0xff]
        %v236 = vld [vmem:[#allocation5 + $0x28] sm:$0xff]
        %v237 = vld [vmem:[#allocation5 + $0x30] sm:$0xff]
        %v238 = vld [vmem:[#allocation5 + $0x38] sm:$0xff]
        %v239 = vld [vmem:[#allocation5 + $0x40] sm:$0xff]
        %v240 = vld [vmem:[#allocation5 + $0x48] sm:$0xff]
        %v241 = vld [vmem:[#allocation5 + $0x50] sm:$0xff]
        %v242 = vld [vmem:[#allocation5 + $0x58] sm:$0xff]
        %v243 = vld [vmem:[#allocation5 + $0x60] sm:$0xff]
        %v244 = vld [vmem:[#allocation5 + $0x68] sm:$0xff]
        %v245 = vld [vmem:[#allocation5 + $0x70] sm:$0xff]
        %v246 = vld [vmem:[#allocation5 + $0x78] sm:$0xff]
        %v247 = vld [vmem:[#allocation7] sm:$0x1]
        %v248 = vlaneseq
        %v249 = vshrl.u32 %v248, 7
        %v250 = vsub.s32 0, %v249
        %v251 = vrot.slane %v247, %v250
        %252 = vmatprep.subr.mxu0 0.0
        %253 = vmatpush1.msra.mxu0 %v231
        %254 = vmatprep.subr.mxu0 0.0
        %255 = vmatpush1.msra.mxu0 %v232
        %256 = vmatprep.subr.mxu0 0.0
        %257 = vmatpush1.msra.mxu0 %v233
        %258 = vmatprep.subr.mxu0 0.0
        %259 = vmatpush1.msra.mxu0 %v234
        %260 = vmatprep.subr.mxu0 0.0
        %261 = vmatpush1.msra.mxu0 %v235
        %262 = vmatprep.subr.mxu0 0.0
        %263 = vmatpush1.msra.mxu0 %v236
        %264 = vmatprep.subr.mxu0 0.0
        %265 = vmatpush1.msra.mxu0 %v237
        %266 = vmatprep.subr.mxu0 0.0
        %267 = vmatpush1.msra.mxu0 %v238
        %268 = vmatprep.subr.mxu0 0.0
        %269 = vmatpush1.msra.mxu0 %v239
        %270 = vmatprep.subr.mxu0 0.0
        %271 = vmatpush1.msra.mxu0 %v240
        %272 = vmatprep.subr.mxu0 0.0
        %273 = vmatpush1.msra.mxu0 %v241
        %274 = vmatprep.subr.mxu0 0.0
        %275 = vmatpush1.msra.mxu0 %v242
        %276 = vmatprep.subr.mxu0 0.0
        %277 = vmatpush1.msra.mxu0 %v243
        %278 = vmatprep.subr.mxu0 0.0
        %279 = vmatpush1.msra.mxu0 %v244
        %280 = vmatprep.subr.mxu0 0.0
        %281 = vmatpush1.msra.mxu0 %v245
        %282 = vmatprep.subr.mxu0 0.0
        %283 = vmatpush1.msra.mxu0 %v246
        %284 = vmatprep.subr.mxu0 0.0
        %285 = vmatpush1.msra.mxu0 0.0
        %286 = vmatprep.subr.mxu0 0.0
        %287 = vmatpush1.msra.mxu0 0.0
        %288 = vmatprep.subr.mxu0 0.0
        %289 = vmatpush1.msra.mxu0 0.0
        %290 = vmatprep.subr.mxu0 0.0
        %291 = vmatpush1.msra.mxu0 0.0
        %292 = vmatprep.subr.mxu0 0.0
        %293 = vmatpush1.msra.mxu0 0.0
        %294 = vmatprep.subr.mxu0 0.0
        %295 = vmatpush1.msra.mxu0 0.0
        %296 = vmatprep.subr.mxu0 0.0
        %297 = vmatpush1.msra.mxu0 0.0
        %298 = vmatprep.subr.mxu0 0.0
        %299 = vmatpush1.msra.mxu0 0.0
        %300 = vmatprep.subr.mxu0 0.0
        %301 = vmatpush1.msra.mxu0 0.0
        %302 = vmatprep.subr.mxu0 0.0
        %303 = vmatpush1.msra.mxu0 0.0
        %304 = vmatprep.subr.mxu0 0.0
        %305 = vmatpush1.msra.mxu0 0.0
        %306 = vmatprep.subr.mxu0 0.0
        %307 = vmatpush1.msra.mxu0 0.0
        %308 = vmatprep.subr.mxu0 0.0
        %309 = vmatpush1.msra.mxu0 0.0
        %310 = vmatprep.subr.mxu0 0.0
        %311 = vmatpush1.msra.mxu0 0.0
        %312 = vmatprep.subr.mxu0 0.0
        %313 = vmatpush1.msra.mxu0 0.0
        %314 = vmatprep.subr.mxu0 0.0
        %315 = vmatpush1.msra.mxu0 0.0
        %316 = vmatprep.mubr.f32.mxu0 0.0
        %317 = vmatmul.mubr.f32.gmra.mrb[0].mxu0 %v218
        %v318 = vpop.f32.mrb[0].mxu0
        %v319 = vadd.f32 %v251, %v318
        %v320 = vpop.f32.mrb[0].mxu0
        %321 = vmatprep.mubr.f32.mxu0 0.0
        %322 = vmatmul.mubr.f32.gmra.mrb[0].mxu0 %v219
        %v323 = vpop.f32.mrb[0].mxu0
        %v324 = vadd.f32 %v251, %v323
        %v325 = vpop.f32.mrb[0].mxu0
        %326 = vmatprep.mubr.f32.mxu0 0.0
        %327 = vmatmul.mubr.f32.gmra.mrb[0].mxu0 %v220
        %v328 = vpop.f32.mrb[0].mxu0
        %v329 = vadd.f32 %v251, %v328
        %v330 = vpop.f32.mrb[0].mxu0
        %331 = vmatprep.mubr.f32.mxu0 0.0
        %332 = vmatmul.mubr.f32.gmra.mrb[0].mxu0 %v221
        %v333 = vpop.f32.mrb[0].mxu0
        %v334 = vadd.f32 %v251, %v333
        %v335 = vpop.f32.mrb[0].mxu0
        %336 = vmatprep.mubr.f32.mxu0 0.0
        %337 = vmatmul.mubr.f32.gmra.mrb[0].mxu0 %v222
        %v338 = vpop.f32.mrb[0].mxu0
        %v339 = vadd.f32 %v251, %v338
        %v340 = vpop.f32.mrb[0].mxu0
        %341 = vmatprep.mubr.f32.mxu0 0.0
        %342 = vmatmul.mubr.f32.gmra.mrb[0].mxu0 %v223
        %v343 = vpop.f32.mrb[0].mxu0
        %v344 = vadd.f32 %v251, %v343
        %v345 = vpop.f32.mrb[0].mxu0
        %346 = vmatprep.mubr.f32.mxu0 0.0
        %347 = vmatmul.mubr.f32.gmra.mrb[0].mxu0 %v224
        %v348 = vpop.f32.mrb[0].mxu0
        %v349 = vadd.f32 %v251, %v348
        %v350 = vpop.f32.mrb[0].mxu0
        %351 = vmatprep.mubr.f32.mxu0 0.0
        %352 = vmatmul.mubr.f32.gmra.mrb[0].mxu0 %v225
        %v353 = vpop.f32.mrb[0].mxu0
        %v354 = vadd.f32 %v251, %v353
        %v355 = vpop.f32.mrb[0].mxu0
        %356 = vmatprep.mubr.f32.mxu0 0.0
        %357 = vmatmul.mubr.f32.gmra.mrb[0].mxu0 %v226
        %v358 = vpop.f32.mrb[0].mxu0
        %v359 = vadd.f32 %v251, %v358
        %v360 = vpop.f32.mrb[0].mxu0
        %361 = vmatprep.mubr.f32.mxu0 0.0
        %362 = vmatmul.mubr.f32.gmra.mrb[0].mxu0 %v227
        %v363 = vpop.f32.mrb[0].mxu0
        %v364 = vadd.f32 %v251, %v363
        %v365 = vpop.f32.mrb[0].mxu0
        %366 = vmatprep.mubr.f32.mxu0 0.0
        %367 = vmatmul.mubr.f32.gmra.mrb[0].mxu0 %v228
        %v368 = vpop.f32.mrb[0].mxu0
        %v369 = vadd.f32 %v251, %v368
        %v370 = vpop.f32.mrb[0].mxu0
        %371 = vmatprep.mubr.f32.mxu0 0.0
        %372 = vmatmul.mubr.f32.gmra.mrb[0].mxu0 %v229
        %v373 = vpop.f32.mrb[0].mxu0
        %v374 = vadd.f32 %v251, %v373
        %v375 = vpop.f32.mrb[0].mxu0
        %376 = vmatprep.mubr.f32.mxu0 0.0
        %377 = vmatmul.mubr.f32.gmra.mrb[0].mxu0 %v230
        %v378 = vpop.f32.mrb[0].mxu0
        %v379 = vadd.f32 %v251, %v378
        %v380 = vpop.f32.mrb[0].mxu0
        %381 = vdwg.mxu0
        %v382 = vmax.f32 %v319, 0.0
        %v383 = vmax.f32 %v324, 0.0
        %v384 = vmax.f32 %v329, 0.0
        %v385 = vmax.f32 %v334, 0.0
        %v386 = vmax.f32 %v339, 0.0
        %v387 = vmax.f32 %v344, 0.0
        %v388 = vmax.f32 %v349, 0.0
        %v389 = vmax.f32 %v354, 0.0
        %v390 = vmax.f32 %v359, 0.0
        %v391 = vmax.f32 %v364, 0.0
        %v392 = vmax.f32 %v369, 0.0
        %v393 = vmax.f32 %v374, 0.0
        %v394 = vmax.f32 %v379, 0.0
        %s395 = scalar_lea.vmem [#allocation5], 128
        %v396 = vld [vmem:[%s395] sm:$0xff]
        %v397 = vld [vmem:[%s395 + $0x8] sm:$0xff]
        %v398 = vld [vmem:[%s395 + $0x10] sm:$0xff]
        %v399 = vld [vmem:[%s395 + $0x18] sm:$0xff]
        %v400 = vld [vmem:[%s395 + $0x20] sm:$0xff]
        %v401 = vld [vmem:[%s395 + $0x28] sm:$0xff]
        %v402 = vld [vmem:[%s395 + $0x30] sm:$0xff]
        %v403 = vld [vmem:[%s395 + $0x38] sm:$0xff]
        %v404 = vld [vmem:[%s395 + $0x40] sm:$0xff]
        %v405 = vld [vmem:[%s395 + $0x48] sm:$0xff]
        %v406 = vld [vmem:[%s395 + $0x50] sm:$0xff]
        %v407 = vld [vmem:[%s395 + $0x58] sm:$0xff]
        %v408 = vld [vmem:[%s395 + $0x60] sm:$0xff]
        %v409 = vld [vmem:[%s395 + $0x68] sm:$0xff]
        %v410 = vld [vmem:[%s395 + $0x70] sm:$0xff]
        %v411 = vld [vmem:[%s395 + $0x78] sm:$0xff]
        %v412 = vld [vmem:[#allocation7 + $0x1] sm:$0x1]
        %v413 = vlaneseq
        %v414 = vshrl.u32 %v413, 7
        %v415 = vsub.s32 0, %v414
        %v416 = vrot.slane %v412, %v415
        %417 = vmatprep.subr.mxu0 0.0
        %418 = vmatpush1.msra.mxu0 %v396
        %419 = vmatprep.subr.mxu0 0.0
        %420 = vmatpush1.msra.mxu0 %v397
        %421 = vmatprep.subr.mxu0 0.0
        %422 = vmatpush1.msra.mxu0 %v398
        %423 = vmatprep.subr.mxu0 0.0
        %424 = vmatpush1.msra.mxu0 %v399
        %425 = vmatprep.subr.mxu0 0.0
        %426 = vmatpush1.msra.mxu0 %v400
        %427 = vmatprep.subr.mxu0 0.0
        %428 = vmatpush1.msra.mxu0 %v401
        %429 = vmatprep.subr.mxu0 0.0
        %430 = vmatpush1.msra.mxu0 %v402
        %431 = vmatprep.subr.mxu0 0.0
        %432 = vmatpush1.msra.mxu0 %v403
        %433 = vmatprep.subr.mxu0 0.0
        %434 = vmatpush1.msra.mxu0 %v404
        %435 = vmatprep.subr.mxu0 0.0
        %436 = vmatpush1.msra.mxu0 %v405
        %437 = vmatprep.subr.mxu0 0.0
        %438 = vmatpush1.msra.mxu0 %v406
        %439 = vmatprep.subr.mxu0 0.0
        %440 = vmatpush1.msra.mxu0 %v407
        %441 = vmatprep.subr.mxu0 0.0
        %442 = vmatpush1.msra.mxu0 %v408
        %443 = vmatprep.subr.mxu0 0.0
        %444 = vmatpush1.msra.mxu0 %v409
        %445 = vmatprep.subr.mxu0 0.0
        %446 = vmatpush1.msra.mxu0 %v410
        %447 = vmatprep.subr.mxu0 0.0
        %448 = vmatpush1.msra.mxu0 %v411
        %449 = vmatprep.subr.mxu0 0.0
        %450 = vmatpush1.msra.mxu0 0.0
        %451 = vmatprep.subr.mxu0 0.0
        %452 = vmatpush1.msra.mxu0 0.0
        %453 = vmatprep.subr.mxu0 0.0
        %454 = vmatpush1.msra.mxu0 0.0
        %455 = vmatprep.subr.mxu0 0.0
        %456 = vmatpush1.msra.mxu0 0.0
        %457 = vmatprep.subr.mxu0 0.0
        %458 = vmatpush1.msra.mxu0 0.0
        %459 = vmatprep.subr.mxu0 0.0
        %460 = vmatpush1.msra.mxu0 0.0
        %461 = vmatprep.subr.mxu0 0.0
        %462 = vmatpush1.msra.mxu0 0.0
        %463 = vmatprep.subr.mxu0 0.0
        %464 = vmatpush1.msra.mxu0 0.0
        %465 = vmatprep.subr.mxu0 0.0
        %466 = vmatpush1.msra.mxu0 0.0
        %467 = vmatprep.subr.mxu0 0.0
        %468 = vmatpush1.msra.mxu0 0.0
        %469 = vmatprep.subr.mxu0 0.0
        %470 = vmatpush1.msra.mxu0 0.0
        %471 = vmatprep.subr.mxu0 0.0
        %472 = vmatpush1.msra.mxu0 0.0
        %473 = vmatprep.subr.mxu0 0.0
        %474 = vmatpush1.msra.mxu0 0.0
        %475 = vmatprep.subr.mxu0 0.0
        %476 = vmatpush1.msra.mxu0 0.0
        %477 = vmatprep.subr.mxu0 0.0
        %478 = vmatpush1.msra.mxu0 0.0
        %479 = vmatprep.subr.mxu0 0.0
        %480 = vmatpush1.msra.mxu0 0.0
        %481 = vmatprep.mubr.f32.mxu0 0.0
        %482 = vmatmul.mubr.f32.gmra.mrb[0].mxu0 %v382
        %v483 = vpop.f32.mrb[0].mxu0
        %v484 = vadd.f32 %v416, %v483
        %v485 = vpop.f32.mrb[0].mxu0
        %486 = vmatprep.mubr.f32.mxu0 0.0
        %487 = vmatmul.mubr.f32.gmra.mrb[0].mxu0 %v383
        %v488 = vpop.f32.mrb[0].mxu0
        %v489 = vadd.f32 %v416, %v488
        %v490 = vpop.f32.mrb[0].mxu0
        %491 = vmatprep.mubr.f32.mxu0 0.0
        %492 = vmatmul.mubr.f32.gmra.mrb[0].mxu0 %v384
        %v493 = vpop.f32.mrb[0].mxu0
        %v494 = vadd.f32 %v416, %v493
        %v495 = vpop.f32.mrb[0].mxu0
        %496 = vmatprep.mubr.f32.mxu0 0.0
        %497 = vmatmul.mubr.f32.gmra.mrb[0].mxu0 %v385
        %v498 = vpop.f32.mrb[0].mxu0
        %v499 = vadd.f32 %v416, %v498
        %v500 = vpop.f32.mrb[0].mxu0
        %501 = vmatprep.mubr.f32.mxu0 0.0
        %502 = vmatmul.mubr.f32.gmra.mrb[0].mxu0 %v386
        %v503 = vpop.f32.mrb[0].mxu0
        %v504 = vadd.f32 %v416, %v503
        %v505 = vpop.f32.mrb[0].mxu0
        %506 = vmatprep.mubr.f32.mxu0 0.0
        %507 = vmatmul.mubr.f32.gmra.mrb[0].mxu0 %v387
        %v508 = vpop.f32.mrb[0].mxu0
        %v509 = vadd.f32 %v416, %v508
        %v510 = vpop.f32.mrb[0].mxu0
        %511 = vmatprep.mubr.f32.mxu0 0.0
        %512 = vmatmul.mubr.f32.gmra.mrb[0].mxu0 %v388
        %v513 = vpop.f32.mrb[0].mxu0
        %v514 = vadd.f32 %v416, %v513
        %v515 = vpop.f32.mrb[0].mxu0
        %516 = vmatprep.mubr.f32.mxu0 0.0
        %517 = vmatmul.mubr.f32.gmra.mrb[0].mxu0 %v389
        %v518 = vpop.f32.mrb[0].mxu0
        %v519 = vadd.f32 %v416, %v518
        %v520 = vpop.f32.mrb[0].mxu0
        %521 = vmatprep.mubr.f32.mxu0 0.0
        %522 = vmatmul.mubr.f32.gmra.mrb[0].mxu0 %v390
        %v523 = vpop.f32.mrb[0].mxu0
        %v524 = vadd.f32 %v416, %v523
        %v525 = vpop.f32.mrb[0].mxu0
        %526 = vmatprep.mubr.f32.mxu0 0.0
        %527 = vmatmul.mubr.f32.gmra.mrb[0].mxu0 %v391
        %v528 = vpop.f32.mrb[0].mxu0
        %v529 = vadd.f32 %v416, %v528
        %v530 = vpop.f32.mrb[0].mxu0
        %531 = vmatprep.mubr.f32.mxu0 0.0
        %532 = vmatmul.mubr.f32.gmra.mrb[0].mxu0 %v392
        %v533 = vpop.f32.mrb[0].mxu0
        %v534 = vadd.f32 %v416, %v533
        %v535 = vpop.f32.mrb[0].mxu0
        %536 = vmatprep.mubr.f32.mxu0 0.0
        %537 = vmatmul.mubr.f32.gmra.mrb[0].mxu0 %v393
        %v538 = vpop.f32.mrb[0].mxu0
        %v539 = vadd.f32 %v416, %v538
        %v540 = vpop.f32.mrb[0].mxu0
        %541 = vmatprep.mubr.f32.mxu0 0.0
        %542 = vmatmul.mubr.f32.gmra.mrb[0].mxu0 %v394
        %v543 = vpop.f32.mrb[0].mxu0
        %v544 = vadd.f32 %v416, %v543
        %v545 = vpop.f32.mrb[0].mxu0
        %546 = vdwg.mxu0
        %v547 = vmax.f32 %v484, 0.0
        %v548 = vmax.f32 %v489, 0.0
        %v549 = vmax.f32 %v494, 0.0
        %v550 = vmax.f32 %v499, 0.0
        %v551 = vmax.f32 %v504, 0.0
        %v552 = vmax.f32 %v509, 0.0
        %v553 = vmax.f32 %v514, 0.0
        %v554 = vmax.f32 %v519, 0.0
        %v555 = vmax.f32 %v524, 0.0
        %v556 = vmax.f32 %v529, 0.0
        %v557 = vmax.f32 %v534, 0.0
        %v558 = vmax.f32 %v539, 0.0
        %v559 = vmax.f32 %v544, 0.0
        %v560 = vlaneseq
        %v561 = vand.u32 %v560, 127
        %vm562 = vcmp.ge.s32.totalorder %v561, 32
        %v563 = vsel %vm562, %v218, 0.0
        %v564 = vsel %vm562, %v219, 0.0
        %v565 = vsel %vm562, %v220, 0.0
        %v566 = vsel %vm562, %v221, 0.0
        %v567 = vsel %vm562, %v222, 0.0
        %v568 = vsel %vm562, %v223, 0.0
        %v569 = vsel %vm562, %v224, 0.0
        %v570 = vsel %vm562, %v225, 0.0
        %v571 = vsel %vm562, %v226, 0.0
        %v572 = vsel %vm562, %v227, 0.0
        %v573 = vsel %vm562, %v228, 0.0
        %v574 = vsel %vm562, %v229, 0.0
        %v575 = vsel %vm562, %v230, 0.0
        %v576 = vadd.f32 %v547, %v563
        %v577 = vadd.f32 %v548, %v564
        %v578 = vadd.f32 %v549, %v565
        %v579 = vadd.f32 %v550, %v566
        %v580 = vadd.f32 %v551, %v567
        %v581 = vadd.f32 %v552, %v568
        %v582 = vadd.f32 %v553, %v569
        %v583 = vadd.f32 %v554, %v570
        %v584 = vadd.f32 %v555, %v571
        %v585 = vadd.f32 %v556, %v572
        %v586 = vadd.f32 %v557, %v573
        %v587 = vadd.f32 %v558, %v574
        %v588 = vadd.f32 %v559, %v575
        %s589 = scalar_lea.vmem [#allocation5], 256
        %v590 = vld [vmem:[%s589] sm:$0xff]
        %v591 = vld [vmem:[%s589 + $0x8] sm:$0xff]
        %v592 = vld [vmem:[%s589 + $0x10] sm:$0xff]
        %v593 = vld [vmem:[%s589 + $0x18] sm:$0xff]
        %v594 = vld [vmem:[%s589 + $0x20] sm:$0xff]
        %v595 = vld [vmem:[%s589 + $0x28] sm:$0xff]
        %v596 = vld [vmem:[%s589 + $0x30] sm:$0xff]
        %v597 = vld [vmem:[%s589 + $0x38] sm:$0xff]
        %v598 = vld [vmem:[%s589 + $0x40] sm:$0xff]
        %v599 = vld [vmem:[%s589 + $0x48] sm:$0xff]
        %v600 = vld [vmem:[%s589 + $0x50] sm:$0xff]
        %v601 = vld [vmem:[%s589 + $0x58] sm:$0xff]
        %v602 = vld [vmem:[%s589 + $0x60] sm:$0xff]
        %v603 = vld [vmem:[%s589 + $0x68] sm:$0xff]
        %v604 = vld [vmem:[%s589 + $0x70] sm:$0xff]
        %v605 = vld [vmem:[%s589 + $0x78] sm:$0xff]
        %v606 = vld [vmem:[#allocation7 + $0x2] sm:$0x1]
        %v607 = vlaneseq
        %v608 = vshrl.u32 %v607, 7
        %v609 = vsub.s32 0, %v608
        %v610 = vrot.slane %v606, %v609
        %611 = vmatprep.subr.mxu0 0.0
        %612 = vmatpush1.msra.mxu0 %v590
        %613 = vmatprep.subr.mxu0 0.0
        %614 = vmatpush1.msra.mxu0 %v591
        %615 = vmatprep.subr.mxu0 0.0
        %616 = vmatpush1.msra.mxu0 %v592
        %617 = vmatprep.subr.mxu0 0.0
        %618 = vmatpush1.msra.mxu0 %v593
        %619 = vmatprep.subr.mxu0 0.0
        %620 = vmatpush1.msra.mxu0 %v594
        %621 = vmatprep.subr.mxu0 0.0
        %622 = vmatpush1.msra.mxu0 %v595
        %623 = vmatprep.subr.mxu0 0.0
        %624 = vmatpush1.msra.mxu0 %v596
        %625 = vmatprep.subr.mxu0 0.0
        %626 = vmatpush1.msra.mxu0 %v597
        %627 = vmatprep.subr.mxu0 0.0
        %628 = vmatpush1.msra.mxu0 %v598
        %629 = vmatprep.subr.mxu0 0.0
        %630 = vmatpush1.msra.mxu0 %v599
        %631 = vmatprep.subr.mxu0 0.0
        %632 = vmatpush1.msra.mxu0 %v600
        %633 = vmatprep.subr.mxu0 0.0
        %634 = vmatpush1.msra.mxu0 %v601
        %635 = vmatprep.subr.mxu0 0.0
        %636 = vmatpush1.msra.mxu0 %v602
        %637 = vmatprep.subr.mxu0 0.0
        %638 = vmatpush1.msra.mxu0 %v603
        %639 = vmatprep.subr.mxu0 0.0
        %640 = vmatpush1.msra.mxu0 %v604
        %641 = vmatprep.subr.mxu0 0.0
        %642 = vmatpush1.msra.mxu0 %v605
        %643 = vmatprep.subr.mxu0 0.0
        %644 = vmatpush1.msra.mxu0 0.0
        %645 = vmatprep.subr.mxu0 0.0
        %646 = vmatpush1.msra.mxu0 0.0
        %647 = vmatprep.subr.mxu0 0.0
        %648 = vmatpush1.msra.mxu0 0.0
        %649 = vmatprep.subr.mxu0 0.0
        %650 = vmatpush1.msra.mxu0 0.0
        %651 = vmatprep.subr.mxu0 0.0
        %652 = vmatpush1.msra.mxu0 0.0
        %653 = vmatprep.subr.mxu0 0.0
        %654 = vmatpush1.msra.mxu0 0.0
        %655 = vmatprep.subr.mxu0 0.0
        %656 = vmatpush1.msra.mxu0 0.0
        %657 = vmatprep.subr.mxu0 0.0
        %658 = vmatpush1.msra.mxu0 0.0
        %659 = vmatprep.subr.mxu0 0.0
        %660 = vmatpush1.msra.mxu0 0.0
        %661 = vmatprep.subr.mxu0 0.0
        %662 = vmatpush1.msra.mxu0 0.0
        %663 = vmatprep.subr.mxu0 0.0
        %664 = vmatpush1.msra.mxu0 0.0
        %665 = vmatprep.subr.mxu0 0.0
        %666 = vmatpush1.msra.mxu0 0.0
        %667 = vmatprep.subr.mxu0 0.0
        %668 = vmatpush1.msra.mxu0 0.0
        %669 = vmatprep.subr.mxu0 0.0
        %670 = vmatpush1.msra.mxu0 0.0
        %671 = vmatprep.subr.mxu0 0.0
        %672 = vmatpush1.msra.mxu0 0.0
        %673 = vmatprep.subr.mxu0 0.0
        %674 = vmatpush1.msra.mxu0 0.0
        %675 = vmatprep.mubr.f32.mxu0 0.0
        %676 = vmatmul.mubr.f32.gmra.mrb[0].mxu0 %v576
        %v677 = vpop.f32.mrb[0].mxu0
        %v678 = vadd.f32 %v610, %v677
        %v679 = vpop.f32.mrb[0].mxu0
        %680 = vmatprep.mubr.f32.mxu0 0.0
        %681 = vmatmul.mubr.f32.gmra.mrb[0].mxu0 %v577
        %v682 = vpop.f32.mrb[0].mxu0
        %v683 = vadd.f32 %v610, %v682
        %v684 = vpop.f32.mrb[0].mxu0
        %685 = vmatprep.mubr.f32.mxu0 0.0
        %686 = vmatmul.mubr.f32.gmra.mrb[0].mxu0 %v578
        %v687 = vpop.f32.mrb[0].mxu0
        %v688 = vadd.f32 %v610, %v687
        %v689 = vpop.f32.mrb[0].mxu0
        %690 = vmatprep.mubr.f32.mxu0 0.0
        %691 = vmatmul.mubr.f32.gmra.mrb[0].mxu0 %v579
        %v692 = vpop.f32.mrb[0].mxu0
        %v693 = vadd.f32 %v610, %v692
        %v694 = vpop.f32.mrb[0].mxu0
        %695 = vmatprep.mubr.f32.mxu0 0.0
        %696 = vmatmul.mubr.f32.gmra.mrb[0].mxu0 %v580
        %v697 = vpop.f32.mrb[0].mxu0
        %v698 = vadd.f32 %v610, %v697
        %v699 = vpop.f32.mrb[0].mxu0
        %700 = vmatprep.mubr.f32.mxu0 0.0
        %701 = vmatmul.mubr.f32.gmra.mrb[0].mxu0 %v581
        %v702 = vpop.f32.mrb[0].mxu0
        %v703 = vadd.f32 %v610, %v702
        %v704 = vpop.f32.mrb[0].mxu0
        %705 = vmatprep.mubr.f32.mxu0 0.0
        %706 = vmatmul.mubr.f32.gmra.mrb[0].mxu0 %v582
        %v707 = vpop.f32.mrb[0].mxu0
        %v708 = vadd.f32 %v610, %v707
        %v709 = vpop.f32.mrb[0].mxu0
        %710 = vmatprep.mubr.f32.mxu0 0.0
        %711 = vmatmul.mubr.f32.gmra.mrb[0].mxu0 %v583
        %v712 = vpop.f32.mrb[0].mxu0
        %v713 = vadd.f32 %v610, %v712
        %v714 = vpop.f32.mrb[0].mxu0
        %715 = vmatprep.mubr.f32.mxu0 0.0
        %716 = vmatmul.mubr.f32.gmra.mrb[0].mxu0 %v584
        %v717 = vpop.f32.mrb[0].mxu0
        %v718 = vadd.f32 %v610, %v717
        %v719 = vpop.f32.mrb[0].mxu0
        %720 = vmatprep.mubr.f32.mxu0 0.0
        %721 = vmatmul.mubr.f32.gmra.mrb[0].mxu0 %v585
        %v722 = vpop.f32.mrb[0].mxu0
        %v723 = vadd.f32 %v610, %v722
        %v724 = vpop.f32.mrb[0].mxu0
        %725 = vmatprep.mubr.f32.mxu0 0.0
        %726 = vmatmul.mubr.f32.gmra.mrb[0].mxu0 %v586
        %v727 = vpop.f32.mrb[0].mxu0
        %v728 = vadd.f32 %v610, %v727
        %v729 = vpop.f32.mrb[0].mxu0
        %730 = vmatprep.mubr.f32.mxu0 0.0
        %731 = vmatmul.mubr.f32.gmra.mrb[0].mxu0 %v587
        %v732 = vpop.f32.mrb[0].mxu0
        %v733 = vadd.f32 %v610, %v732
        %v734 = vpop.f32.mrb[0].mxu0
        %735 = vmatprep.mubr.f32.mxu0 0.0
        %736 = vmatmul.mubr.f32.gmra.mrb[0].mxu0 %v588
        %v737 = vpop.f32.mrb[0].mxu0
        %v738 = vadd.f32 %v610, %v737
        %v739 = vpop.f32.mrb[0].mxu0
        %740 = vdwg.mxu0
        %vm741 = vcmp.gt.f32.partialorder %v678, 0.0
        %vm742 = vcmp.gt.f32.partialorder %v683, 0.0
        %vm743 = vcmp.gt.f32.partialorder %v688, 0.0
        %vm744 = vcmp.gt.f32.partialorder %v693, 0.0
        %vm745 = vcmp.gt.f32.partialorder %v698, 0.0
        %vm746 = vcmp.gt.f32.partialorder %v703, 0.0
        %vm747 = vcmp.gt.f32.partialorder %v708, 0.0
        %vm748 = vcmp.gt.f32.partialorder %v713, 0.0
        %vm749 = vcmp.gt.f32.partialorder %v718, 0.0
        %vm750 = vcmp.gt.f32.partialorder %v723, 0.0
        %vm751 = vcmp.gt.f32.partialorder %v728, 0.0
        %vm752 = vcmp.gt.f32.partialorder %v733, 0.0
        %vm753 = vcmp.gt.f32.partialorder %v738, 0.0
        %v754 = vmul.f32 %v678, 0.2
        %v755 = vmul.f32 %v683, 0.2
        %v756 = vmul.f32 %v688, 0.2
        %v757 = vmul.f32 %v693, 0.2
        %v758 = vmul.f32 %v698, 0.2
        %v759 = vmul.f32 %v703, 0.2
        %v760 = vmul.f32 %v708, 0.2
        %v761 = vmul.f32 %v713, 0.2
        %v762 = vmul.f32 %v718, 0.2
        %v763 = vmul.f32 %v723, 0.2
        %v764 = vmul.f32 %v728, 0.2
        %v765 = vmul.f32 %v733, 0.2
        %v766 = vmul.f32 %v738, 0.2
        %v767 = vsel %vm741, %v678, %v754
        %v768 = vsel %vm742, %v683, %v755
        %v769 = vsel %vm743, %v688, %v756
        %v770 = vsel %vm744, %v693, %v757
        %v771 = vsel %vm745, %v698, %v758
        %v772 = vsel %vm746, %v703, %v759
        %v773 = vsel %vm747, %v708, %v760
        %v774 = vsel %vm748, %v713, %v761
        %v775 = vsel %vm749, %v718, %v762
        %v776 = vsel %vm750, %v723, %v763
        %v777 = vsel %vm751, %v728, %v764
        %v778 = vsel %vm752, %v733, %v765
        %v779 = vsel %vm753, %v738, %v766
        %s780 = scalar_lea.vmem [#allocation5], 384
        %v781 = vld [vmem:[%s780] sm:$0xff]
        %v782 = vld [vmem:[%s780 + $0x8] sm:$0xff]
        %v783 = vld [vmem:[%s780 + $0x10] sm:$0xff]
        %v784 = vld [vmem:[%s780 + $0x18] sm:$0xff]
        %v785 = vld [vmem:[%s780 + $0x20] sm:$0xff]
        %v786 = vld [vmem:[%s780 + $0x28] sm:$0xff]
        %v787 = vld [vmem:[%s780 + $0x30] sm:$0xff]
        %v788 = vld [vmem:[%s780 + $0x38] sm:$0xff]
        %v789 = vld [vmem:[%s780 + $0x40] sm:$0xff]
        %v790 = vld [vmem:[%s780 + $0x48] sm:$0xff]
        %v791 = vld [vmem:[%s780 + $0x50] sm:$0xff]
        %v792 = vld [vmem:[%s780 + $0x58] sm:$0xff]
        %v793 = vld [vmem:[%s780 + $0x60] sm:$0xff]
        %v794 = vld [vmem:[%s780 + $0x68] sm:$0xff]
        %v795 = vld [vmem:[%s780 + $0x70] sm:$0xff]
        %v796 = vld [vmem:[%s780 + $0x78] sm:$0xff]
        %v797 = vld [vmem:[#allocation7 + $0x3] sm:$0x1]
        %v798 = vlaneseq
        %v799 = vshrl.u32 %v798, 7
        %v800 = vsub.s32 0, %v799
        %v801 = vrot.slane %v797, %v800
        %802 = vmatprep.subr.mxu0 0.0
        %803 = vmatpush1.msra.mxu0 %v781
        %804 = vmatprep.subr.mxu0 0.0
        %805 = vmatpush1.msra.mxu0 %v782
        %806 = vmatprep.subr.mxu0 0.0
        %807 = vmatpush1.msra.mxu0 %v783
        %808 = vmatprep.subr.mxu0 0.0
        %809 = vmatpush1.msra.mxu0 %v784
        %810 = vmatprep.subr.mxu0 0.0
        %811 = vmatpush1.msra.mxu0 %v785
        %812 = vmatprep.subr.mxu0 0.0
        %813 = vmatpush1.msra.mxu0 %v786
        %814 = vmatprep.subr.mxu0 0.0
        %815 = vmatpush1.msra.mxu0 %v787
        %816 = vmatprep.subr.mxu0 0.0
        %817 = vmatpush1.msra.mxu0 %v788
        %818 = vmatprep.subr.mxu0 0.0
        %819 = vmatpush1.msra.mxu0 %v789
        %820 = vmatprep.subr.mxu0 0.0
        %821 = vmatpush1.msra.mxu0 %v790
        %822 = vmatprep.subr.mxu0 0.0
        %823 = vmatpush1.msra.mxu0 %v791
        %824 = vmatprep.subr.mxu0 0.0
        %825 = vmatpush1.msra.mxu0 %v792
        %826 = vmatprep.subr.mxu0 0.0
        %827 = vmatpush1.msra.mxu0 %v793
        %828 = vmatprep.subr.mxu0 0.0
        %829 = vmatpush1.msra.mxu0 %v794
        %830 = vmatprep.subr.mxu0 0.0
        %831 = vmatpush1.msra.mxu0 %v795
        %832 = vmatprep.subr.mxu0 0.0
        %833 = vmatpush1.msra.mxu0 %v796
        %834 = vmatprep.subr.mxu0 0.0
        %835 = vmatpush1.msra.mxu0 0.0
        %836 = vmatprep.subr.mxu0 0.0
        %837 = vmatpush1.msra.mxu0 0.0
        %838 = vmatprep.subr.mxu0 0.0
        %839 = vmatpush1.msra.mxu0 0.0
        %840 = vmatprep.subr.mxu0 0.0
        %841 = vmatpush1.msra.mxu0 0.0
        %842 = vmatprep.subr.mxu0 0.0
        %843 = vmatpush1.msra.mxu0 0.0
        %844 = vmatprep.subr.mxu0 0.0
        %845 = vmatpush1.msra.mxu0 0.0
        %846 = vmatprep.subr.mxu0 0.0
        %847 = vmatpush1.msra.mxu0 0.0
        %848 = vmatprep.subr.mxu0 0.0
        %849 = vmatpush1.msra.mxu0 0.0
        %850 = vmatprep.subr.mxu0 0.0
        %851 = vmatpush1.msra.mxu0 0.0
        %852 = vmatprep.subr.mxu0 0.0
        %853 = vmatpush1.msra.mxu0 0.0
        %854 = vmatprep.subr.mxu0 0.0
        %855 = vmatpush1.msra.mxu0 0.0
        %856 = vmatprep.subr.mxu0 0.0
        %857 = vmatpush1.msra.mxu0 0.0
        %858 = vmatprep.subr.mxu0 0.0
        %859 = vmatpush1.msra.mxu0 0.0
        %860 = vmatprep.subr.mxu0 0.0
        %861 = vmatpush1.msra.mxu0 0.0
        %862 = vmatprep.subr.mxu0 0.0
        %863 = vmatpush1.msra.mxu0 0.0
        %864 = vmatprep.subr.mxu0 0.0
        %865 = vmatpush1.msra.mxu0 0.0
        %866 = vmatprep.mubr.f32.mxu0 0.0
        %867 = vmatmul.mubr.f32.gmra.mrb[0].mxu0 %v767
        %v868 = vpop.f32.mrb[0].mxu0
        %v869 = vadd.f32 %v801, %v868
        %v870 = vpop.f32.mrb[0].mxu0
        %871 = vmatprep.mubr.f32.mxu0 0.0
        %872 = vmatmul.mubr.f32.gmra.mrb[0].mxu0 %v768
        %v873 = vpop.f32.mrb[0].mxu0
        %v874 = vadd.f32 %v801, %v873
        %v875 = vpop.f32.mrb[0].mxu0
        %876 = vmatprep.mubr.f32.mxu0 0.0
        %877 = vmatmul.mubr.f32.gmra.mrb[0].mxu0 %v769
        %v878 = vpop.f32.mrb[0].mxu0
        %v879 = vadd.f32 %v801, %v878
        %v880 = vpop.f32.mrb[0].mxu0
        %881 = vmatprep.mubr.f32.mxu0 0.0
        %882 = vmatmul.mubr.f32.gmra.mrb[0].mxu0 %v770
        %v883 = vpop.f32.mrb[0].mxu0
        %v884 = vadd.f32 %v801, %v883
        %v885 = vpop.f32.mrb[0].mxu0
        %886 = vmatprep.mubr.f32.mxu0 0.0
        %887 = vmatmul.mubr.f32.gmra.mrb[0].mxu0 %v771
        %v888 = vpop.f32.mrb[0].mxu0
        %v889 = vadd.f32 %v801, %v888
        %v890 = vpop.f32.mrb[0].mxu0
        %891 = vmatprep.mubr.f32.mxu0 0.0
        %892 = vmatmul.mubr.f32.gmra.mrb[0].mxu0 %v772
        %v893 = vpop.f32.mrb[0].mxu0
        %v894 = vadd.f32 %v801, %v893
        %v895 = vpop.f32.mrb[0].mxu0
        %896 = vmatprep.mubr.f32.mxu0 0.0
        %897 = vmatmul.mubr.f32.gmra.mrb[0].mxu0 %v773
        %v898 = vpop.f32.mrb[0].mxu0
        %v899 = vadd.f32 %v801, %v898
        %v900 = vpop.f32.mrb[0].mxu0
        %901 = vmatprep.mubr.f32.mxu0 0.0
        %902 = vmatmul.mubr.f32.gmra.mrb[0].mxu0 %v774
        %v903 = vpop.f32.mrb[0].mxu0
        %v904 = vadd.f32 %v801, %v903
        %v905 = vpop.f32.mrb[0].mxu0
        %906 = vmatprep.mubr.f32.mxu0 0.0
        %907 = vmatmul.mubr.f32.gmra.mrb[0].mxu0 %v775
        %v908 = vpop.f32.mrb[0].mxu0
        %v909 = vadd.f32 %v801, %v908
        %v910 = vpop.f32.mrb[0].mxu0
        %911 = vmatprep.mubr.f32.mxu0 0.0
        %912 = vmatmul.mubr.f32.gmra.mrb[0].mxu0 %v776
        %v913 = vpop.f32.mrb[0].mxu0
        %v914 = vadd.f32 %v801, %v913
        %v915 = vpop.f32.mrb[0].mxu0
        %916 = vmatprep.mubr.f32.mxu0 0.0
        %917 = vmatmul.mubr.f32.gmra.mrb[0].mxu0 %v777
        %v918 = vpop.f32.mrb[0].mxu0
        %v919 = vadd.f32 %v801, %v918
        %v920 = vpop.f32.mrb[0].mxu0
        %921 = vmatprep.mubr.f32.mxu0 0.0
        %922 = vmatmul.mubr.f32.gmra.mrb[0].mxu0 %v778
        %v923 = vpop.f32.mrb[0].mxu0
        %v924 = vadd.f32 %v801, %v923
        %v925 = vpop.f32.mrb[0].mxu0
        %926 = vmatprep.mubr.f32.mxu0 0.0
        %927 = vmatmul.mubr.f32.gmra.mrb[0].mxu0 %v779
        %v928 = vpop.f32.mrb[0].mxu0
        %v929 = vadd.f32 %v801, %v928
        %v930 = vpop.f32.mrb[0].mxu0
        %931 = vdwg.mxu0
        %vm932 = vcmp.gt.f32.partialorder %v869, 0.0
        %vm933 = vcmp.gt.f32.partialorder %v874, 0.0
        %vm934 = vcmp.gt.f32.partialorder %v879, 0.0
        %vm935 = vcmp.gt.f32.partialorder %v884, 0.0
        %vm936 = vcmp.gt.f32.partialorder %v889, 0.0
        %vm937 = vcmp.gt.f32.partialorder %v894, 0.0
        %vm938 = vcmp.gt.f32.partialorder %v899, 0.0
        %vm939 = vcmp.gt.f32.partialorder %v904, 0.0
        %vm940 = vcmp.gt.f32.partialorder %v909, 0.0
        %vm941 = vcmp.gt.f32.partialorder %v914, 0.0
        %vm942 = vcmp.gt.f32.partialorder %v919, 0.0
        %vm943 = vcmp.gt.f32.partialorder %v924, 0.0
        %vm944 = vcmp.gt.f32.partialorder %v929, 0.0
        %v945 = vmul.f32 %v869, 0.2
        %v946 = vmul.f32 %v874, 0.2
        %v947 = vmul.f32 %v879, 0.2
        %v948 = vmul.f32 %v884, 0.2
        %v949 = vmul.f32 %v889, 0.2
        %v950 = vmul.f32 %v894, 0.2
        %v951 = vmul.f32 %v899, 0.2
        %v952 = vmul.f32 %v904, 0.2
        %v953 = vmul.f32 %v909, 0.2
        %v954 = vmul.f32 %v914, 0.2
        %v955 = vmul.f32 %v919, 0.2
        %v956 = vmul.f32 %v924, 0.2
        %v957 = vmul.f32 %v929, 0.2
        %v958 = vsel %vm932, %v869, %v945
        %v959 = vsel %vm933, %v874, %v946
        %v960 = vsel %vm934, %v879, %v947
        %v961 = vsel %vm935, %v884, %v948
        %v962 = vsel %vm936, %v889, %v949
        %v963 = vsel %vm937, %v894, %v950
        %v964 = vsel %vm938, %v899, %v951
        %v965 = vsel %vm939, %v904, %v952
        %v966 = vsel %vm940, %v909, %v953
        %v967 = vsel %vm941, %v914, %v954
        %v968 = vsel %vm942, %v919, %v955
        %v969 = vsel %vm943, %v924, %v956
        %v970 = vsel %vm944, %v929, %v957
        %s971 = scalar_lea.vmem [#allocation5], 512
        %v972 = vld [vmem:[%s971] sm:$0xff]
        %v973 = vld [vmem:[%s971 + $0x8] sm:$0xff]
        %v974 = vld [vmem:[%s971 + $0x10] sm:$0xff]
        %v975 = vld [vmem:[%s971 + $0x18] sm:$0xff]
        %v976 = vld [vmem:[%s971 + $0x20] sm:$0xff]
        %v977 = vld [vmem:[%s971 + $0x28] sm:$0xff]
        %v978 = vld [vmem:[%s971 + $0x30] sm:$0xff]
        %v979 = vld [vmem:[%s971 + $0x38] sm:$0xff]
        %v980 = vld [vmem:[%s971 + $0x40] sm:$0xff]
        %v981 = vld [vmem:[%s971 + $0x48] sm:$0xff]
        %v982 = vld [vmem:[%s971 + $0x50] sm:$0xff]
        %v983 = vld [vmem:[%s971 + $0x58] sm:$0xff]
        %v984 = vld [vmem:[%s971 + $0x60] sm:$0xff]
        %v985 = vld [vmem:[%s971 + $0x68] sm:$0xff]
        %v986 = vld [vmem:[%s971 + $0x70] sm:$0xff]
        %v987 = vld [vmem:[%s971 + $0x78] sm:$0xff]
        %v988 = vld [vmem:[#allocation7 + $0x4] sm:$0x1]
        %v989 = vlaneseq
        %v990 = vshrl.u32 %v989, 7
        %v991 = vsub.s32 0, %v990
        %v992 = vrot.slane %v988, %v991
        %993 = vmatprep.subr.mxu0 0.0
        %994 = vmatpush1.msra.mxu0 %v972
        %995 = vmatprep.subr.mxu0 0.0
        %996 = vmatpush1.msra.mxu0 %v973
        %997 = vmatprep.subr.mxu0 0.0
        %998 = vmatpush1.msra.mxu0 %v974
        %999 = vmatprep.subr.mxu0 0.0
        %1000 = vmatpush1.msra.mxu0 %v975
        %1001 = vmatprep.subr.mxu0 0.0
        %1002 = vmatpush1.msra.mxu0 %v976
        %1003 = vmatprep.subr.mxu0 0.0
        %1004 = vmatpush1.msra.mxu0 %v977
        %1005 = vmatprep.subr.mxu0 0.0
        %1006 = vmatpush1.msra.mxu0 %v978
        %1007 = vmatprep.subr.mxu0 0.0
        %1008 = vmatpush1.msra.mxu0 %v979
        %1009 = vmatprep.subr.mxu0 0.0
        %1010 = vmatpush1.msra.mxu0 %v980
        %1011 = vmatprep.subr.mxu0 0.0
        %1012 = vmatpush1.msra.mxu0 %v981
        %1013 = vmatprep.subr.mxu0 0.0
        %1014 = vmatpush1.msra.mxu0 %v982
        %1015 = vmatprep.subr.mxu0 0.0
        %1016 = vmatpush1.msra.mxu0 %v983
        %1017 = vmatprep.subr.mxu0 0.0
        %1018 = vmatpush1.msra.mxu0 %v984
        %1019 = vmatprep.subr.mxu0 0.0
        %1020 = vmatpush1.msra.mxu0 %v985
        %1021 = vmatprep.subr.mxu0 0.0
        %1022 = vmatpush1.msra.mxu0 %v986
        %1023 = vmatprep.subr.mxu0 0.0
        %1024 = vmatpush1.msra.mxu0 %v987
        %1025 = vmatprep.subr.mxu0 0.0
        %1026 = vmatpush1.msra.mxu0 0.0
        %1027 = vmatprep.subr.mxu0 0.0
        %1028 = vmatpush1.msra.mxu0 0.0
        %1029 = vmatprep.subr.mxu0 0.0
        %1030 = vmatpush1.msra.mxu0 0.0
        %1031 = vmatprep.subr.mxu0 0.0
        %1032 = vmatpush1.msra.mxu0 0.0
        %1033 = vmatprep.subr.mxu0 0.0
        %1034 = vmatpush1.msra.mxu0 0.0
        %1035 = vmatprep.subr.mxu0 0.0
        %1036 = vmatpush1.msra.mxu0 0.0
        %1037 = vmatprep.subr.mxu0 0.0
        %1038 = vmatpush1.msra.mxu0 0.0
        %1039 = vmatprep.subr.mxu0 0.0
        %1040 = vmatpush1.msra.mxu0 0.0
        %1041 = vmatprep.subr.mxu0 0.0
        %1042 = vmatpush1.msra.mxu0 0.0
        %1043 = vmatprep.subr.mxu0 0.0
        %1044 = vmatpush1.msra.mxu0 0.0
        %1045 = vmatprep.subr.mxu0 0.0
        %1046 = vmatpush1.msra.mxu0 0.0
        %1047 = vmatprep.subr.mxu0 0.0
        %1048 = vmatpush1.msra.mxu0 0.0
        %1049 = vmatprep.subr.mxu0 0.0
        %1050 = vmatpush1.msra.mxu0 0.0
        %1051 = vmatprep.subr.mxu0 0.0
        %1052 = vmatpush1.msra.mxu0 0.0
        %1053 = vmatprep.subr.mxu0 0.0
        %1054 = vmatpush1.msra.mxu0 0.0
        %1055 = vmatprep.subr.mxu0 0.0
        %1056 = vmatpush1.msra.mxu0 0.0
        %1057 = vmatprep.mubr.f32.mxu0 0.0
        %1058 = vmatmul.mubr.f32.gmra.mrb[0].mxu0 %v958
        %v1059 = vpop.f32.mrb[0].mxu0
        %v1060 = vadd.f32 %v992, %v1059
        %v1061 = vpop.f32.mrb[0].mxu0
        %1062 = vmatprep.mubr.f32.mxu0 0.0
        %1063 = vmatmul.mubr.f32.gmra.mrb[0].mxu0 %v959
        %v1064 = vpop.f32.mrb[0].mxu0
        %v1065 = vadd.f32 %v992, %v1064
        %v1066 = vpop.f32.mrb[0].mxu0
        %1067 = vmatprep.mubr.f32.mxu0 0.0
        %1068 = vmatmul.mubr.f32.gmra.mrb[0].mxu0 %v960
        %v1069 = vpop.f32.mrb[0].mxu0
        %v1070 = vadd.f32 %v992, %v1069
        %v1071 = vpop.f32.mrb[0].mxu0
        %1072 = vmatprep.mubr.f32.mxu0 0.0
        %1073 = vmatmul.mubr.f32.gmra.mrb[0].mxu0 %v961
        %v1074 = vpop.f32.mrb[0].mxu0
        %v1075 = vadd.f32 %v992, %v1074
        %v1076 = vpop.f32.mrb[0].mxu0
        %1077 = vmatprep.mubr.f32.mxu0 0.0
        %1078 = vmatmul.mubr.f32.gmra.mrb[0].mxu0 %v962
        %v1079 = vpop.f32.mrb[0].mxu0
        %v1080 = vadd.f32 %v992, %v1079
        %v1081 = vpop.f32.mrb[0].mxu0
        %1082 = vmatprep.mubr.f32.mxu0 0.0
        %1083 = vmatmul.mubr.f32.gmra.mrb[0].mxu0 %v963
        %v1084 = vpop.f32.mrb[0].mxu0
        %v1085 = vadd.f32 %v992, %v1084
        %v1086 = vpop.f32.mrb[0].mxu0
        %1087 = vmatprep.mubr.f32.mxu0 0.0
        %1088 = vmatmul.mubr.f32.gmra.mrb[0].mxu0 %v964
        %v1089 = vpop.f32.mrb[0].mxu0
        %v1090 = vadd.f32 %v992, %v1089
        %v1091 = vpop.f32.mrb[0].mxu0
        %1092 = vmatprep.mubr.f32.mxu0 0.0
        %1093 = vmatmul.mubr.f32.gmra.mrb[0].mxu0 %v965
        %v1094 = vpop.f32.mrb[0].mxu0
        %v1095 = vadd.f32 %v992, %v1094
        %v1096 = vpop.f32.mrb[0].mxu0
        %1097 = vmatprep.mubr.f32.mxu0 0.0
        %1098 = vmatmul.mubr.f32.gmra.mrb[0].mxu0 %v966
        %v1099 = vpop.f32.mrb[0].mxu0
        %v1100 = vadd.f32 %v992, %v1099
        %v1101 = vpop.f32.mrb[0].mxu0
        %1102 = vmatprep.mubr.f32.mxu0 0.0
        %1103 = vmatmul.mubr.f32.gmra.mrb[0].mxu0 %v967
        %v1104 = vpop.f32.mrb[0].mxu0
        %v1105 = vadd.f32 %v992, %v1104
        %v1106 = vpop.f32.mrb[0].mxu0
        %1107 = vmatprep.mubr.f32.mxu0 0.0
        %1108 = vmatmul.mubr.f32.gmra.mrb[0].mxu0 %v968
        %v1109 = vpop.f32.mrb[0].mxu0
        %v1110 = vadd.f32 %v992, %v1109
        %v1111 = vpop.f32.mrb[0].mxu0
        %1112 = vmatprep.mubr.f32.mxu0 0.0
        %1113 = vmatmul.mubr.f32.gmra.mrb[0].mxu0 %v969
        %v1114 = vpop.f32.mrb[0].mxu0
        %v1115 = vadd.f32 %v992, %v1114
        %v1116 = vpop.f32.mrb[0].mxu0
        %1117 = vmatprep.mubr.f32.mxu0 0.0
        %1118 = vmatmul.mubr.f32.gmra.mrb[0].mxu0 %v970
        %v1119 = vpop.f32.mrb[0].mxu0
        %v1120 = vadd.f32 %v992, %v1119
        %v1121 = vpop.f32.mrb[0].mxu0
        %1122 = vdwg.mxu0
        %1123 = vst [vmem:[%s215] sm:$0xff] %v1060
        %1124 = vst [vmem:[%s215 + $0x8] sm:$0xff] %v1065
        %1125 = vst [vmem:[%s215 + $0x10] sm:$0xff] %v1070
        %1126 = vst [vmem:[%s215 + $0x18] sm:$0xff] %v1075
        %1127 = vst [vmem:[%s215 + $0x20] sm:$0xff] %v1080
        %1128 = vst [vmem:[%s215 + $0x28] sm:$0xff] %v1085
        %1129 = vst [vmem:[%s215 + $0x30] sm:$0xff] %v1090
        %1130 = vst [vmem:[%s215 + $0x38] sm:$0xff] %v1095
        %1131 = vst [vmem:[%s215 + $0x40] sm:$0xff] %v1100
        %1132 = vst [vmem:[%s215 + $0x48] sm:$0xff] %v1105
        %1133 = vst [vmem:[%s215 + $0x50] sm:$0xff] %v1110
        %1134 = vst [vmem:[%s215 + $0x58] sm:$0xff] %v1115
        %1135 = vst [vmem:[%s215 + $0x60] sm:$0xff] %v1120
        %s1136 = sand.u32 %s97, 1
        %s1137 = scalar_lea.sflag [#allocation4], %s1136
        %s1138 = sand.u32 %s97, 1
        %s1139 = smul.addr %s1138, 104
        %s1140 = scalar_lea.vmem [#allocation8], %s1139
        // Predicated region
        $region45: #{tpu_custom_call.1} parent=31 // pred_check
          %p1141 = pneg %p107
        $region46: #{tpu_custom_call.1} parent=31 // pred_check_branch
          %1143 = sbr.rel (%p1141) target = $region48
        $region47: #{tpu_custom_call.1} parent=31 // pred_region
          %s1144 = smul.u32 13, %s21
          %s1146 = ssub.s32 1664, 1664
          %1147 = vsyncadd %s1137, %s1146
          %s1148 = smul.addr %s1144, 128
          %s1149 = scalar_lea.hbm %s3, %s1148
          %s1150 = sshll.u32 %s1140, 4
          %s1151 = int_to_ptr.vmem [resolvable:$true] %s1150
          %1156 = dma.vmem_to_hbm [thread:$0]  %s1151, 1664, %s1149, %s1137, 128, 128, 8
        $region48: #{tpu_custom_call.1} parent=31 // pred_fallthru
          _
      $region32: #{tpu_custom_call.1} parent=5 // pred_fallthru
        _
      %p1157 = scmp.le.s32.totalorder 2, %s16
      // Predicated region
      $region49: #{tpu_custom_call.1} parent=5 // pred_check
        %p1158 = pneg %p1157
      $region50: #{tpu_custom_call.1} parent=5 // pred_check_branch
        %1160 = sbr.rel (%p1158) target = $region52
      $region51: #{tpu_custom_call.1} parent=5 // pred_region
        %s1161 = ssub.s32 %s16, 2
        // Predicated region
        $region53: #{tpu_custom_call.1} parent=51 // pred_check
          %p1162 = pneg %p113
        $region54: #{tpu_custom_call.1} parent=51 // pred_check_branch
          %1164 = sbr.rel (%p1162) target = $region56
        $region55: #{tpu_custom_call.1} parent=51 // pred_region
          %s1165 = sand.u32 %s98, 1
          %s1166 = scalar_lea.sflag [#allocation4], %s1165
          %s1167 = sand.u32 %s98, 1
          %s1168 = smul.addr %s1167, 104
          %s1169 = scalar_lea.vmem [#allocation8], %s1168
          %1170 = dma.done %s1166, 1664
        $region56: #{tpu_custom_call.1} parent=51 // pred_fallthru
          _
      $region52: #{tpu_custom_call.1} parent=5 // pred_fallthru
        _
    $region6: #{tpu_custom_call.1} parent=1 // loop_footer
      %s20 = sadd.s32 1, %s16
    $region7: #{tpu_custom_call.1} parent=1 // loop_footer_branch
      %15 = sbr.rel target = $region3
    $region8: #{tpu_custom_call.1} parent=1 // loop_exit
      _
    %1171 = vsyncpa [#allocation3], 1
    %s1172 = scalar_lea.sflag [#allocation3], 1
    %1173 = vsyncpa %s1172, 1
    %1174 = vsyncpa [#allocation6], 1
    %1175 = vsyncpa [#allocation4], 1
    %s1176 = scalar_lea.sflag [#allocation4], 1
    %1177 = vsyncpa %s1176, 1

</llo_original>
